<compile_context>
chip_gen: v7x
topology: tpu7x:2x2x1
jax: 0.10.0
libtpu: 0.0.40
codegen_flags: <defaults>
</compile_context>

<pallas_src>
import jax
import jax.numpy as jnp
from jax.experimental import pallas as pl
from jax.experimental.pallas import tpu as pltpu


def _actor_critic_kernel(obs_ref, w1_ref, b1_ref, w2_ref, b2_ref,
                         wh_ref, bh_ref, out_ref):
    # obs_ref: (TB, A*O)       block-diagonal weights (VMEM-resident):
    # w1_ref:  (A*O,  A*32)    b1_ref: (1, A*32)
    # w2_ref:  (A*32, A*64)    b2_ref: (1, A*64)
    # wh_ref:  (A*64, HOUT)    bh_ref: (1, HOUT)    HOUT = round_up(A*(ACT+1), 128)
    # out_ref: (TB, HOUT)      single lane-dense 128-aligned store per tile
    x = obs_ref[...]
    h1 = jnp.dot(x, w1_ref[...], preferred_element_type=jnp.float32) + b1_ref[...]
    h1 = jnp.maximum(h1, 0.0)
    h2 = jnp.dot(h1, w2_ref[...], preferred_element_type=jnp.float32) + b2_ref[...]
    h2 = jnp.maximum(h2, 0.0)
    head = jnp.dot(h2, wh_ref[...], preferred_element_type=jnp.float32) + bh_ref[...]
    out_ref[...] = head.astype(out_ref.dtype)


def _block_diag(w):
    """(A, fin, fout) per-agent weights -> (A*fin, A*fout) block-diagonal matrix."""
    A, fin, fout = w.shape
    eye = jnp.eye(A, dtype=w.dtype)
    return jnp.einsum('aij,ab->aibj', w, eye).reshape(A * fin, A * fout)


def prepare_params(params):
    """One-time weight transform (hoisted out of the per-call wrapper):
    fuse policy+value heads, block-diagonalize all layers, pad head lanes to 128."""
    w1, b1, w2, b2, wp, bp, wv, bv = params
    A, O, H1 = w1.shape
    H2 = w2.shape[-1]
    ACT = wp.shape[-1]
    n_head = A * (ACT + 1)
    HOUT = max(128, ((n_head + 127) // 128) * 128)

    wh = jnp.concatenate([wp, wv], axis=-1)                  # (A, H2, ACT+1)
    bh = jnp.concatenate([bp, bv], axis=-1)                  # (A, 1,  ACT+1)

    w1_bd = _block_diag(w1)                                  # (A*O,  A*H1)
    w2_bd = _block_diag(w2)                                  # (A*H1, A*H2)
    wh_bd = _block_diag(wh)                                  # (A*H2, n_head)
    wh_bd = jnp.pad(wh_bd, ((0, 0), (0, HOUT - n_head)))     # single, shared pad

    b1_bd = b1.reshape(1, A * H1)
    b2_bd = b2.reshape(1, A * H2)
    bh_bd = jnp.pad(bh.reshape(1, n_head), ((0, 0), (0, HOUT - n_head)))

    return dict(w1=w1_bd, b1=b1_bd, w2=w2_bd, b2=b2_bd, wh=wh_bd, bh=bh_bd,
                agent_num=A, obs_shape=O, action_shape=ACT, hout=HOUT)


def _pick_tb(B):
    """Batch-tile size: big tiles (HBM roofline), but >=2 tiles for mid/large B
    so the 'parallel' grid axis can shard across v7x's 2 TensorCores."""
    TB_MAX = 2048
    if B > TB_MAX:
        return TB_MAX
    if B >= 256:
        half = ((-(-B // 2)) + 7) // 8 * 8   # ceil(B/2), sublane-aligned
        if half < B:
            return half
    return B


def independent_actor_critic(local_obs, prep):
    """local_obs: (B, A, O) float32 — PyTorch (batch, agent, obs) convention."""
    B, A, O = local_obs.shape
    assert A == prep["agent_num"] and O == prep["obs_shape"]
    ACT = prep["action_shape"]
    HOUT = prep["hout"]
    n_head = A * (ACT + 1)

    # Free reshape (merges contiguous minor dims) — no transpose, no HBM copy.
    obs = local_obs.astype(jnp.float32).reshape(B, A * O)

    TB = _pick_tb(B)
    nb = pl.cdiv(B, TB)          # ragged B: Pallas masks the partial last block

    def _resident(arr):
        n = arr.ndim
        return pl.BlockSpec(arr.shape, lambda i, _n=n: (0,) * _n)

    out = pl.pallas_call(
        _actor_critic_kernel,
        grid=(nb,),
        in_specs=[
            pl.BlockSpec((TB, A * O), lambda i: (i, 0)),     # obs: batch-tiled
            _resident(prep["w1"]), _resident(prep["b1"]),
            _resident(prep["w2"]), _resident(prep["b2"]),
            _resident(prep["wh"]), _resident(prep["bh"]),
        ],
        out_specs=pl.BlockSpec((TB, HOUT), lambda i: (i, 0)),
        out_shape=jax.ShapeDtypeStruct((B, HOUT), jnp.float32),
        compiler_params=pltpu.CompilerParams(
            dimension_semantics=("parallel",),
            vmem_limit_bytes=48 * 1024 * 1024,               # safe on v7x 64 MiB VMEM
        ),
    )(obs, prep["w1"], prep["b1"], prep["w2"], prep["b2"],
      prep["wh"], prep["bh"])

    # Packed layout: row = [agent0 logit|value, agent1 logit|value, ..., 0-pad].
    packed = out[:, :n_head].reshape(B, A, ACT + 1)
    return {"logit": packed[..., :ACT], "value": packed[..., ACT:]}


def init_params(key, agent_num, obs_shape, action_shape):
    """Deterministic PyTorch-style nn.Linear init (U(-1/sqrt(fan_in), 1/sqrt(fan_in)))."""
    def linear(k, fan_in, fan_out):
        kw, kb = jax.random.split(k)
        bound = 1.0 / float(fan_in) ** 0.5
        w = jax.random.uniform(kw, (agent_num, fan_in, fan_out), jnp.float32,
                               minval=-bound, maxval=bound)
        b = jax.random.uniform(kb, (agent_num, 1, fan_out), jnp.float32,
                               minval=-bound, maxval=bound)
        return w, b

    k1, k2, k3, k4 = jax.random.split(key, 4)
    w1, b1 = linear(k1, obs_shape, 32)
    w2, b2 = linear(k2, 32, 64)
    wp, bp = linear(k3, 64, action_shape)
    wv, bv = linear(k4, 64, 1)
    return (w1, b1, w2, b2, wp, bp, wv, bv)


def _reference(local_obs, params):
    """Pure-JAX reference mirroring the per-agent PyTorch loop."""
    w1, b1, w2, b2, wp, bp, wv, bv = params
    logits, values = [], []
    A = local_obs.shape[1]
    for i in range(A):
        x = local_obs[:, i, :]                                   # (B, O)
        h1 = jnp.maximum(x @ w1[i] + b1[i], 0.0)
        h2 = jnp.maximum(h1 @ w2[i] + b2[i], 0.0)
        logits.append(h2 @ wp[i] + bp[i])
        values.append(h2 @ wv[i] + bv[i])
    return (jnp.stack(logits, axis=1), jnp.stack(values, axis=1))


if __name__ == "__main__":
    B, A, O, ACT = 4, 3, 16, 6
    key = jax.random.PRNGKey(0)
    k_obs, k_par = jax.random.split(key)

    local_obs = jax.random.normal(k_obs, (B, A, O), dtype=jnp.float32)
    params = init_params(k_par, A, O, ACT)
    prep = prepare_params(params)            # one-time weight transform

    out = independent_actor_critic(local_obs, prep)
    jax.block_until_ready(out)

    ref_logit, ref_value = _reference(local_obs, params)
    assert out["logit"].shape == (B, A, ACT)
    assert out["value"].shape == (B, A, 1)
    assert jnp.allclose(out["logit"], ref_logit, atol=1e-5, rtol=1e-5)
    assert jnp.allclose(out["value"], ref_value, atol=1e-5, rtol=1e-5)

    # Exercise the multi-tile path: 2 "parallel" batch tiles with a ragged
    # (partial) last block, no wrapper-side jnp.pad.
    B2 = 260
    obs2 = jax.random.normal(jax.random.PRNGKey(1), (B2, A, O), dtype=jnp.float32)
    out2 = independent_actor_critic(obs2, prep)
    jax.block_until_ready(out2)
    ref_logit2, ref_value2 = _reference(obs2, params)
    assert out2["logit"].shape == (B2, A, ACT)
    assert out2["value"].shape == (B2, A, 1)
    assert jnp.allclose(out2["logit"], ref_logit2, atol=1e-5, rtol=1e-5)
    assert jnp.allclose(out2["value"], ref_value2, atol=1e-5, rtol=1e-5)

    print("KERNEL_OK")
</pallas_src>

<mosaic_0001>
module attributes {stable_mosaic.version = 11 : i64} {
  func.func @_actor_critic_kernel(%arg0: i32, %arg1: memref<4x48xf32, #tpu.memory_space<vmem>>, %arg2: memref<48x96xf32, #tpu.memory_space<vmem>>, %arg3: memref<1x96xf32, #tpu.memory_space<vmem>>, %arg4: memref<96x192xf32, #tpu.memory_space<vmem>>, %arg5: memref<1x192xf32, #tpu.memory_space<vmem>>, %arg6: memref<192x128xf32, #tpu.memory_space<vmem>>, %arg7: memref<1x128xf32, #tpu.memory_space<vmem>>, %arg8: memref<4x128xf32, #tpu.memory_space<vmem>>) attributes {dimension_semantics = [#tpu.dimension_semantics<parallel>], iteration_bounds = array<i64: 1>, scalar_prefetch = 0 : i64, scratch_operands = 0 : i64, tpu.core_type = #tpu.core_type<tc>, window_params = [{transform_indices = @transform_0, window_bounds = array<i64: 4, 48>}, {pipeline_mode = #tpu.pipeline_mode<synchronous>, transform_indices = @transform_1, window_bounds = array<i64: 48, 96>}, {pipeline_mode = #tpu.pipeline_mode<synchronous>, transform_indices = @transform_2, window_bounds = array<i64: 1, 96>}, {pipeline_mode = #tpu.pipeline_mode<synchronous>, transform_indices = @transform_3, window_bounds = array<i64: 96, 192>}, {pipeline_mode = #tpu.pipeline_mode<synchronous>, transform_indices = @transform_4, window_bounds = array<i64: 1, 192>}, {pipeline_mode = #tpu.pipeline_mode<synchronous>, transform_indices = @transform_5, window_bounds = array<i64: 192, 128>}, {pipeline_mode = #tpu.pipeline_mode<synchronous>, transform_indices = @transform_6, window_bounds = array<i64: 1, 128>}, {transform_indices = @transform_7, window_bounds = array<i64: 4, 128>}]} {
    %c0 = arith.constant 0 : index
    %c0_0 = arith.constant 0 : index
    %0 = vector.load %arg1[%c0, %c0_0] : memref<4x48xf32, #tpu.memory_space<vmem>>, vector<4x48xf32>
    %c0_1 = arith.constant 0 : index
    %c0_2 = arith.constant 0 : index
    %1 = vector.load %arg2[%c0_1, %c0_2] : memref<48x96xf32, #tpu.memory_space<vmem>>, vector<48x96xf32>
    %cst = arith.constant dense<0.000000e+00> : vector<4x96xf32>
    %2 = tpu.matmul %0, %1, %cst {dimension_numbers = #tpu.dot_dimension_numbers<[1], [0], [0], [1], [0, 0, 1, 1], [], []>} : vector<4x48xf32>, vector<48x96xf32>, vector<4x96xf32> -> vector<4x96xf32>
    %c0_3 = arith.constant 0 : index
    %c0_4 = arith.constant 0 : index
    %3 = vector.load %arg3[%c0_3, %c0_4] : memref<1x96xf32, #tpu.memory_space<vmem>>, vector<1x96xf32>
    %4 = vector.broadcast %3 : vector<1x96xf32> to vector<4x96xf32>
    %5 = arith.addf %2, %4 : vector<4x96xf32>
    %cst_5 = arith.constant 0.000000e+00 : f32
    %6 = vector.broadcast %cst_5 : f32 to vector<4x96xf32>
    %7 = arith.maximumf %5, %6 : vector<4x96xf32>
    %c0_6 = arith.constant 0 : index
    %c0_7 = arith.constant 0 : index
    %8 = vector.load %arg4[%c0_6, %c0_7] : memref<96x192xf32, #tpu.memory_space<vmem>>, vector<96x192xf32>
    %cst_8 = arith.constant dense<0.000000e+00> : vector<4x192xf32>
    %9 = tpu.matmul %7, %8, %cst_8 {dimension_numbers = #tpu.dot_dimension_numbers<[1], [0], [0], [1], [0, 0, 1, 1], [], []>} : vector<4x96xf32>, vector<96x192xf32>, vector<4x192xf32> -> vector<4x192xf32>
    %c0_9 = arith.constant 0 : index
    %c0_10 = arith.constant 0 : index
    %10 = vector.load %arg5[%c0_9, %c0_10] : memref<1x192xf32, #tpu.memory_space<vmem>>, vector<1x192xf32>
    %11 = vector.broadcast %10 : vector<1x192xf32> to vector<4x192xf32>
    %12 = arith.addf %9, %11 : vector<4x192xf32>
    %cst_11 = arith.constant 0.000000e+00 : f32
    %13 = vector.broadcast %cst_11 : f32 to vector<4x192xf32>
    %14 = arith.maximumf %12, %13 : vector<4x192xf32>
    %c0_12 = arith.constant 0 : index
    %c0_13 = arith.constant 0 : index
    %15 = vector.load %arg6[%c0_12, %c0_13] : memref<192x128xf32, #tpu.memory_space<vmem>>, vector<192x128xf32>
    %cst_14 = arith.constant dense<0.000000e+00> : vector<4x128xf32>
    %16 = tpu.matmul %14, %15, %cst_14 {dimension_numbers = #tpu.dot_dimension_numbers<[1], [0], [0], [1], [0, 0, 1, 1], [], []>} : vector<4x192xf32>, vector<192x128xf32>, vector<4x128xf32> -> vector<4x128xf32>
    %c0_15 = arith.constant 0 : index
    %c0_16 = arith.constant 0 : index
    %17 = vector.load %arg7[%c0_15, %c0_16] : memref<1x128xf32, #tpu.memory_space<vmem>>, vector<1x128xf32>
    %18 = vector.broadcast %17 : vector<1x128xf32> to vector<4x128xf32>
    %19 = arith.addf %16, %18 : vector<4x128xf32>
    %c0_17 = arith.constant 0 : index
    %c0_18 = arith.constant 0 : index
    %20 = vector.load %arg8[%c0_17, %c0_18] : memref<4x128xf32, #tpu.memory_space<vmem>>, vector<4x128xf32>
    tpu.vector_store %arg8[%c0_17, %c0_18], %19 {strides = array<i32>} : memref<4x128xf32, #tpu.memory_space<vmem>>, vector<4x128xf32>,
    return
  }
  func.func @transform_0(%arg0: i32) -> (i32, i32) {
    %c0_i32 = arith.constant 0 : i32
    %c0_i32_0 = arith.constant 0 : i32
    return %arg0, %c0_i32 : i32, i32
  }
  func.func @transform_1(%arg0: i32) -> (i32, i32) {
    %c0_i32 = arith.constant 0 : i32
    %c0_i32_0 = arith.constant 0 : i32
    %c0_i32_1 = arith.constant 0 : i32
    return %c0_i32, %c0_i32_0 : i32, i32
  }
  func.func @transform_2(%arg0: i32) -> (i32, i32) {
    %c0_i32 = arith.constant 0 : i32
    %c0_i32_0 = arith.constant 0 : i32
    %c0_i32_1 = arith.constant 0 : i32
    return %c0_i32, %c0_i32_0 : i32, i32
  }
  func.func @transform_3(%arg0: i32) -> (i32, i32) {
    %c0_i32 = arith.constant 0 : i32
    %c0_i32_0 = arith.constant 0 : i32
    %c0_i32_1 = arith.constant 0 : i32
    return %c0_i32, %c0_i32_0 : i32, i32
  }
  func.func @transform_4(%arg0: i32) -> (i32, i32) {
    %c0_i32 = arith.constant 0 : i32
    %c0_i32_0 = arith.constant 0 : i32
    %c0_i32_1 = arith.constant 0 : i32
    return %c0_i32, %c0_i32_0 : i32, i32
  }
  func.func @transform_5(%arg0: i32) -> (i32, i32) {
    %c0_i32 = arith.constant 0 : i32
    %c0_i32_0 = arith.constant 0 : i32
    %c0_i32_1 = arith.constant 0 : i32
    return %c0_i32, %c0_i32_0 : i32, i32
  }
  func.func @transform_6(%arg0: i32) -> (i32, i32) {
    %c0_i32 = arith.constant 0 : i32
    %c0_i32_0 = arith.constant 0 : i32
    %c0_i32_1 = arith.constant 0 : i32
    return %c0_i32, %c0_i32_0 : i32, i32
  }
  func.func @transform_7(%arg0: i32) -> (i32, i32) {
    %c0_i32 = arith.constant 0 : i32
    %c0_i32_0 = arith.constant 0 : i32
    return %arg0, %c0_i32 : i32, i32
  }
}

</mosaic_0001>

<llo_original>
// kernel: tpu_custom_call.1
$region0: #{tpu_custom_call.1}
  #allocation0 [shape = 'u32[]', space=smem, size = 0x4, offset = 0x4, fixed_abs, tag = 'smem constant byte address 0x4 - core index']
  #allocation1 [shape = 'u32[144,128]{1,0:T(1,128)}', space=vmem, size = 0x12000, scoped, tag = 'internal scratch']
  %s0 = inlined_call_operand.hbm [shape: f32[4,48], index: 0, kind: input, shape index: {}]
  %s1 = inlined_call_operand.hbm [shape: f32[48,96], index: 1, kind: input, shape index: {}]
  %s2 = inlined_call_operand.vmem [shape: f32[1,96], index: 2, kind: input, shape index: {}]
  %s3 = inlined_call_operand.hbm [shape: f32[96,192], index: 3, kind: input, shape index: {}]
  %s4 = inlined_call_operand.vmem [shape: f32[1,192], index: 4, kind: input, shape index: {}]
  %s5 = inlined_call_operand.hbm [shape: f32[192,128], index: 5, kind: input, shape index: {}]
  %s6 = inlined_call_operand.vmem [shape: f32[1,128], index: 6, kind: input, shape index: {}]
  %s7 = inlined_call_operand.hbm [shape: f32[4,128], index: 7, kind: output, shape index: {}]
  %s8 = sld [smem:[#allocation0]]
  $region54: #{tpu_custom_call.1} parent=0
    _
  %s10 = ssub.s32 1, %s8
  %s11 = scalar_select 0, %s10, %s8
  $region1: #{tpu_custom_call.1} parent=0
    #allocation2 [shape = 'u8[2048]{0}', space=vmem, size = 0x800, scoped, tag = 'input window, operand 0, single buffered']
    #allocation3 [shape = 's32[1]{0}', space=sflag, size = 0x4, scoped, tag = 'scoped memory for tpu_custom_call.1']
    #allocation4 [shape = 's32[1]{0}', space=sflag, size = 0x4, scoped, tag = 'scoped memory for tpu_custom_call.1']
    #allocation5 [shape = 'u8[24576]{0}', space=vmem, size = 0x6000, scoped, tag = 'input window, operand 1, single buffered']
    #allocation6 [shape = 's32[1]{0}', space=sflag, size = 0x4, scoped, tag = 'scoped memory for tpu_custom_call.1']
    #allocation7 [shape = 'u8[98304]{0}', space=vmem, size = 0x18000, scoped, tag = 'input window, operand 3, single buffered']
    #allocation8 [shape = 'u8[98304]{0}', space=vmem, size = 0x18000, scoped, tag = 'input window, operand 5, single buffered']
    #allocation9 [shape = 's32[1]{0}', space=sflag, size = 0x4, scoped, tag = 'scoped memory for tpu_custom_call.1']
    #allocation10 [shape = 'u8[2048]{0}', space=vmem, size = 0x800, scoped, tag = 'output window, operand 0, single buffered']
    %12 = vsyncpa [#allocation3], 0
    %13 = vsyncpa [#allocation6], 0
    %14 = vsyncpa [#allocation9], 0
    %15 = vsyncpa [#allocation4], 0
    // Predicated region
    $region2: #{tpu_custom_call.1} parent=1 // pred_check
      _
    $region3: #{tpu_custom_call.1} parent=1 // pred_check_branch
      %17 = sbr.rel (0) target = $region5
    $region4: #{tpu_custom_call.1} parent=1 // pred_region
      %s19 = ssub.s32 64, 64
      %20 = vsyncadd [#allocation3], %s19
      %s22 = sshll.u32 [#allocation2], 4
      %s23 = int_to_ptr.vmem [resolvable:$true] %s22
      %25 = dma.hbm_to_vmem [thread:$0]  %s0, 64, %s23, [#allocation3]
    $region5: #{tpu_custom_call.1} parent=1 // pred_fallthru
      _
    // Predicated region
    $region6: #{tpu_custom_call.1} parent=1 // pred_check
      _
    $region7: #{tpu_custom_call.1} parent=1 // pred_check_branch
      %27 = sbr.rel (0) target = $region9
    $region8: #{tpu_custom_call.1} parent=1 // pred_region
      %s29 = ssub.s32 768, 768
      %30 = vsyncadd [#allocation6], %s29
      %s31 = sshll.u32 [#allocation5], 4
      %s32 = int_to_ptr.vmem [resolvable:$true] %s31
      %37 = dma.hbm_to_vmem [thread:$0]  %s1, 768, %s32, [#allocation6], 128, 128, 8
    $region9: #{tpu_custom_call.1} parent=1 // pred_fallthru
      _
    // Predicated region
    $region10: #{tpu_custom_call.1} parent=1 // pred_check
      _
    $region11: #{tpu_custom_call.1} parent=1 // pred_check_branch
      %39 = sbr.rel (0) target = $region13
    $region12: #{tpu_custom_call.1} parent=1 // pred_region
      _
    $region13: #{tpu_custom_call.1} parent=1 // pred_fallthru
      _
    // Predicated region
    $region14: #{tpu_custom_call.1} parent=1 // pred_check
      _
    $region15: #{tpu_custom_call.1} parent=1 // pred_check_branch
      %41 = sbr.rel (0) target = $region17
    $region16: #{tpu_custom_call.1} parent=1 // pred_region
      %s43 = ssub.s32 3072, 3072
      %44 = vsyncadd [#allocation6], %s43
      %s45 = sshll.u32 [#allocation7], 4
      %s46 = int_to_ptr.vmem [resolvable:$true] %s45
      %51 = dma.hbm_to_vmem [thread:$0]  %s3, 3072, %s46, [#allocation6], 256, 256, 16
    $region17: #{tpu_custom_call.1} parent=1 // pred_fallthru
      _
    // Predicated region
    $region18: #{tpu_custom_call.1} parent=1 // pred_check
      _
    $region19: #{tpu_custom_call.1} parent=1 // pred_check_branch
      %53 = sbr.rel (0) target = $region21
    $region20: #{tpu_custom_call.1} parent=1 // pred_region
      _
    $region21: #{tpu_custom_call.1} parent=1 // pred_fallthru
      _
    // Predicated region
    $region22: #{tpu_custom_call.1} parent=1 // pred_check
      _
    $region23: #{tpu_custom_call.1} parent=1 // pred_check_branch
      %55 = sbr.rel (0) target = $region25
    $region24: #{tpu_custom_call.1} parent=1 // pred_region
      %s57 = ssub.s32 3072, 3072
      %58 = vsyncadd [#allocation9], %s57
      %s59 = sshll.u32 [#allocation8], 4
      %s60 = int_to_ptr.vmem [resolvable:$true] %s59
      %65 = dma.hbm_to_vmem [thread:$0]  %s5, 3072, %s60, [#allocation9], 128, 128, 8
    $region25: #{tpu_custom_call.1} parent=1 // pred_fallthru
      _
    // Predicated region
    $region26: #{tpu_custom_call.1} parent=1 // pred_check
      _
    $region27: #{tpu_custom_call.1} parent=1 // pred_check_branch
      %67 = sbr.rel (0) target = $region29
    $region28: #{tpu_custom_call.1} parent=1 // pred_region
      _
    $region29: #{tpu_custom_call.1} parent=1 // pred_fallthru
      _
    // Predicated region
    $region30: #{tpu_custom_call.1} parent=1 // pred_check
      _
    $region31: #{tpu_custom_call.1} parent=1 // pred_check_branch
      %69 = sbr.rel (0) target = $region33
    $region32: #{tpu_custom_call.1} parent=1 // pred_region
      %70 = dma.done [#allocation3], 64
    $region33: #{tpu_custom_call.1} parent=1 // pred_fallthru
      _
    // Predicated region
    $region34: #{tpu_custom_call.1} parent=1 // pred_check
      _
    $region35: #{tpu_custom_call.1} parent=1 // pred_check_branch
      %72 = sbr.rel (0) target = $region37
    $region36: #{tpu_custom_call.1} parent=1 // pred_region
      %73 = dma.done [#allocation6], 768
    $region37: #{tpu_custom_call.1} parent=1 // pred_fallthru
      _
    // Predicated region
    $region38: #{tpu_custom_call.1} parent=1 // pred_check
      _
    $region39: #{tpu_custom_call.1} parent=1 // pred_check_branch
      %75 = sbr.rel (0) target = $region41
    $region40: #{tpu_custom_call.1} parent=1 // pred_region
      %76 = dma.done [#allocation6], 3072
    $region41: #{tpu_custom_call.1} parent=1 // pred_fallthru
      _
    // Predicated region
    $region42: #{tpu_custom_call.1} parent=1 // pred_check
      _
    $region43: #{tpu_custom_call.1} parent=1 // pred_check_branch
      %78 = sbr.rel (0) target = $region45
    $region44: #{tpu_custom_call.1} parent=1 // pred_region
      %79 = dma.done [#allocation9], 3072
    $region45: #{tpu_custom_call.1} parent=1 // pred_fallthru
      _
    %v80 = vld [vmem:[#allocation2] sm:$0xf]
    %v81 = vld [vmem:[#allocation5] sm:$0xff]
    %v82 = vld [vmem:[#allocation5 + $0x8] sm:$0xff]
    %v83 = vld [vmem:[#allocation5 + $0x10] sm:$0xff]
    %v84 = vld [vmem:[#allocation5 + $0x18] sm:$0xff]
    %v85 = vld [vmem:[#allocation5 + $0x20] sm:$0xff]
    %v86 = vld [vmem:[#allocation5 + $0x28] sm:$0xff]
    %v87 = vld [vmem:[%s2] sm:$0x1]
    %v89 = vlaneseq
    %v90 = vshrl.u32 %v89, 7
    %v91 = vsub.s32 0, %v90
    %v92 = vrot.slane %v87, %v91
    %vm94 = vcmask 392192
    %v96 = vsel %vm94, %v80, 0
    %98 = vmatprep.subr.mxu0 0.0
    %99 = vmatpush1.msra.mxu0 %v81
    %100 = vmatprep.subr.mxu0 0.0
    %101 = vmatpush1.msra.mxu0 %v82
    %102 = vmatprep.subr.mxu0 0.0
    %103 = vmatpush1.msra.mxu0 %v83
    %104 = vmatprep.subr.mxu0 0.0
    %105 = vmatpush1.msra.mxu0 %v84
    %106 = vmatprep.subr.mxu0 0.0
    %107 = vmatpush1.msra.mxu0 %v85
    %108 = vmatprep.subr.mxu0 0.0
    %109 = vmatpush1.msra.mxu0 %v86
    %110 = vmatprep.subr.mxu0 0.0
    %111 = vmatpush1.msra.mxu0 0.0
    %112 = vmatprep.subr.mxu0 0.0
    %113 = vmatpush1.msra.mxu0 0.0
    %114 = vmatprep.subr.mxu0 0.0
    %115 = vmatpush1.msra.mxu0 0.0
    %116 = vmatprep.subr.mxu0 0.0
    %117 = vmatpush1.msra.mxu0 0.0
    %118 = vmatprep.subr.mxu0 0.0
    %119 = vmatpush1.msra.mxu0 0.0
    %120 = vmatprep.subr.mxu0 0.0
    %121 = vmatpush1.msra.mxu0 0.0
    %122 = vmatprep.subr.mxu0 0.0
    %123 = vmatpush1.msra.mxu0 0.0
    %124 = vmatprep.subr.mxu0 0.0
    %125 = vmatpush1.msra.mxu0 0.0
    %126 = vmatprep.subr.mxu0 0.0
    %127 = vmatpush1.msra.mxu0 0.0
    %128 = vmatprep.subr.mxu0 0.0
    %129 = vmatpush1.msra.mxu0 0.0
    %130 = vmatprep.subr.mxu0 0.0
    %131 = vmatpush1.msra.mxu0 0.0
    %132 = vmatprep.subr.mxu0 0.0
    %133 = vmatpush1.msra.mxu0 0.0
    %134 = vmatprep.subr.mxu0 0.0
    %135 = vmatpush1.msra.mxu0 0.0
    %136 = vmatprep.subr.mxu0 0.0
    %137 = vmatpush1.msra.mxu0 0.0
    %138 = vmatprep.subr.mxu0 0.0
    %139 = vmatpush1.msra.mxu0 0.0
    %140 = vmatprep.subr.mxu0 0.0
    %141 = vmatpush1.msra.mxu0 0.0
    %142 = vmatprep.subr.mxu0 0.0
    %143 = vmatpush1.msra.mxu0 0.0
    %144 = vmatprep.subr.mxu0 0.0
    %145 = vmatpush1.msra.mxu0 0.0
    %146 = vmatprep.subr.mxu0 0.0
    %147 = vmatpush1.msra.mxu0 0.0
    %148 = vmatprep.subr.mxu0 0.0
    %149 = vmatpush1.msra.mxu0 0.0
    %150 = vmatprep.subr.mxu0 0.0
    %151 = vmatpush1.msra.mxu0 0.0
    %152 = vmatprep.subr.mxu0 0.0
    %153 = vmatpush1.msra.mxu0 0.0
    %154 = vmatprep.subr.mxu0 0.0
    %155 = vmatpush1.msra.mxu0 0.0
    %156 = vmatprep.subr.mxu0 0.0
    %157 = vmatpush1.msra.mxu0 0.0
    %158 = vmatprep.subr.mxu0 0.0
    %159 = vmatpush1.msra.mxu0 0.0
    %160 = vmatprep.subr.mxu0 0.0
    %161 = vmatpush1.msra.mxu0 0.0
    %162 = vmatprep.mubr.f32.mxu0 0.0
    %163 = vmatmul.mubr.f32.gmra.mrb[0].mxu0 %v96
    %v164 = vpop.f32.mrb[0].mxu0
    %v165 = vadd.f32 %v92, %v164
    %v166 = vpop.f32.mrb[0].mxu0
    %167 = vdwg.mxu0
    %v168 = vmax.f32 %v165, 0.0
    %v169 = vld [vmem:[#allocation7] sm:$0xff]
    %v170 = vld [vmem:[#allocation7 + $0x8] sm:$0xff]
    %v171 = vld [vmem:[#allocation7 + $0x10] sm:$0xff]
    %v172 = vld [vmem:[#allocation7 + $0x18] sm:$0xff]
    %v173 = vld [vmem:[#allocation7 + $0x20] sm:$0xff]
    %v174 = vld [vmem:[#allocation7 + $0x28] sm:$0xff]
    %v175 = vld [vmem:[#allocation7 + $0x30] sm:$0xff]
    %v176 = vld [vmem:[#allocation7 + $0x38] sm:$0xff]
    %v177 = vld [vmem:[#allocation7 + $0x40] sm:$0xff]
    %v178 = vld [vmem:[#allocation7 + $0x48] sm:$0xff]
    %v179 = vld [vmem:[#allocation7 + $0x50] sm:$0xff]
    %v180 = vld [vmem:[#allocation7 + $0x58] sm:$0xff]
    %v181 = vld [vmem:[#allocation7 + $0x60] sm:$0xff]
    %v182 = vld [vmem:[#allocation7 + $0x68] sm:$0xff]
    %v183 = vld [vmem:[#allocation7 + $0x70] sm:$0xff]
    %v184 = vld [vmem:[#allocation7 + $0x78] sm:$0xff]
    %v185 = vld [vmem:[#allocation7 + $0x80] sm:$0xff]
    %v186 = vld [vmem:[#allocation7 + $0x88] sm:$0xff]
    %v187 = vld [vmem:[#allocation7 + $0x90] sm:$0xff]
    %v188 = vld [vmem:[#allocation7 + $0x98] sm:$0xff]
    %v189 = vld [vmem:[#allocation7 + $0xa0] sm:$0xff]
    %v190 = vld [vmem:[#allocation7 + $0xa8] sm:$0xff]
    %v191 = vld [vmem:[#allocation7 + $0xb0] sm:$0xff]
    %v192 = vld [vmem:[#allocation7 + $0xb8] sm:$0xff]
    %v193 = vld [vmem:[%s4] sm:$0x3]
    %v195 = vlaneseq
    %v196 = vshrl.u32 %v195, 7
    %v197 = vsub.s32 0, %v196
    %v198 = vrot.slane %v193, %v197
    %v199 = vlaneseq
    %v200 = vshrl.u32 %v199, 7
    %v201 = vsub.s32 1, %v200
    %v202 = vrot.slane %v193, %v201
    %vm205 = vcmask 785408
    %v207 = vsel %vm205, %v168, 0
    %209 = vmatprep.subr.mxu0 %v170
    %210 = vmatpush1.msra.mxu0 %v169
    %211 = vmatprep.subr.mxu0 %v172
    %212 = vmatpush1.msra.mxu0 %v171
    %213 = vmatprep.subr.mxu0 %v174
    %214 = vmatpush1.msra.mxu0 %v173
    %215 = vmatprep.subr.mxu0 %v176
    %216 = vmatpush1.msra.mxu0 %v175
    %217 = vmatprep.subr.mxu0 %v178
    %218 = vmatpush1.msra.mxu0 %v177
    %219 = vmatprep.subr.mxu0 %v180
    %220 = vmatpush1.msra.mxu0 %v179
    %221 = vmatprep.subr.mxu0 %v182
    %222 = vmatpush1.msra.mxu0 %v181
    %223 = vmatprep.subr.mxu0 %v184
    %224 = vmatpush1.msra.mxu0 %v183
    %225 = vmatprep.subr.mxu0 %v186
    %226 = vmatpush1.msra.mxu0 %v185
    %227 = vmatprep.subr.mxu0 %v188
    %228 = vmatpush1.msra.mxu0 %v187
    %229 = vmatprep.subr.mxu0 %v190
    %230 = vmatpush1.msra.mxu0 %v189
    %231 = vmatprep.subr.mxu0 %v192
    %232 = vmatpush1.msra.mxu0 %v191
    %233 = vmatprep.subr.mxu0 0.0
    %234 = vmatpush1.msra.mxu0 0.0
    %235 = vmatprep.subr.mxu0 0.0
    %236 = vmatpush1.msra.mxu0 0.0
    %237 = vmatprep.subr.mxu0 0.0
    %238 = vmatpush1.msra.mxu0 0.0
    %239 = vmatprep.subr.mxu0 0.0
    %240 = vmatpush1.msra.mxu0 0.0
    %241 = vmatprep.subr.mxu0 0.0
    %242 = vmatpush1.msra.mxu0 0.0
    %243 = vmatprep.subr.mxu0 0.0
    %244 = vmatpush1.msra.mxu0 0.0
    %245 = vmatprep.subr.mxu0 0.0
    %246 = vmatpush1.msra.mxu0 0.0
    %247 = vmatprep.subr.mxu0 0.0
    %248 = vmatpush1.msra.mxu0 0.0
    %249 = vmatprep.subr.mxu0 0.0
    %250 = vmatpush1.msra.mxu0 0.0
    %251 = vmatprep.subr.mxu0 0.0
    %252 = vmatpush1.msra.mxu0 0.0
    %253 = vmatprep.subr.mxu0 0.0
    %254 = vmatpush1.msra.mxu0 0.0
    %255 = vmatprep.subr.mxu0 0.0
    %256 = vmatpush1.msra.mxu0 0.0
    %257 = vmatprep.subr.mxu0 0.0
    %258 = vmatpush1.msra.mxu0 0.0
    %259 = vmatprep.subr.mxu0 0.0
    %260 = vmatpush1.msra.mxu0 0.0
    %261 = vmatprep.subr.mxu0 0.0
    %262 = vmatpush1.msra.mxu0 0.0
    %263 = vmatprep.subr.mxu0 0.0
    %264 = vmatpush1.msra.mxu0 0.0
    %265 = vmatprep.subr.mxu0 0.0
    %266 = vmatpush1.msra.mxu0 0.0
    %267 = vmatprep.subr.mxu0 0.0
    %268 = vmatpush1.msra.mxu0 0.0
    %269 = vmatprep.subr.mxu0 0.0
    %270 = vmatpush1.msra.mxu0 0.0
    %271 = vmatprep.subr.mxu0 0.0
    %272 = vmatpush1.msra.mxu0 0.0
    %273 = vmatprep.mubr.f32.mxu0 0.0
    %274 = vmatmul.mubr.f32.gmra.mrb[0].mxu0 %v207
    %v275 = vpop.f32.mrb[0].mxu0
    %v276 = vadd.f32 %v198, %v275
    %v277 = vpop.f32.mrb[0].mxu0
    %v278 = vadd.f32 %v202, %v277
    %279 = vdwg.mxu0
    %v280 = vmax.f32 %v276, 0.0
    %v281 = vmax.f32 %v278, 0.0
    %v282 = vld [vmem:[#allocation8] sm:$0xff]
    %v283 = vld [vmem:[#allocation8 + $0x8] sm:$0xff]
    %v284 = vld [vmem:[#allocation8 + $0x10] sm:$0xff]
    %v285 = vld [vmem:[#allocation8 + $0x18] sm:$0xff]
    %v286 = vld [vmem:[#allocation8 + $0x20] sm:$0xff]
    %v287 = vld [vmem:[#allocation8 + $0x28] sm:$0xff]
    %v288 = vld [vmem:[#allocation8 + $0x30] sm:$0xff]
    %v289 = vld [vmem:[#allocation8 + $0x38] sm:$0xff]
    %v290 = vld [vmem:[#allocation8 + $0x40] sm:$0xff]
    %v291 = vld [vmem:[#allocation8 + $0x48] sm:$0xff]
    %v292 = vld [vmem:[#allocation8 + $0x50] sm:$0xff]
    %v293 = vld [vmem:[#allocation8 + $0x58] sm:$0xff]
    %v294 = vld [vmem:[#allocation8 + $0x60] sm:$0xff]
    %v295 = vld [vmem:[#allocation8 + $0x68] sm:$0xff]
    %v296 = vld [vmem:[#allocation8 + $0x70] sm:$0xff]
    %v297 = vld [vmem:[#allocation8 + $0x78] sm:$0xff]
    %v298 = vld [vmem:[#allocation8 + $0x80] sm:$0xff]
    %v299 = vld [vmem:[#allocation8 + $0x88] sm:$0xff]
    %v300 = vld [vmem:[#allocation8 + $0x90] sm:$0xff]
    %v301 = vld [vmem:[#allocation8 + $0x98] sm:$0xff]
    %v302 = vld [vmem:[#allocation8 + $0xa0] sm:$0xff]
    %v303 = vld [vmem:[#allocation8 + $0xa8] sm:$0xff]
    %v304 = vld [vmem:[#allocation8 + $0xb0] sm:$0xff]
    %v305 = vld [vmem:[#allocation8 + $0xb8] sm:$0xff]
    %v306 = vld [vmem:[%s6] sm:$0x1]
    %v308 = vlaneseq
    %v309 = vshrl.u32 %v308, 7
    %v310 = vsub.s32 0, %v309
    %v311 = vrot.slane %v306, %v310
    %vm313 = vcmask 523264
    %v315 = vsel %vm313, %v281, 0
    %317 = vmatprep.subr.mxu0 0.0
    %318 = vmatpush1.msra.mxu0 %v282
    %319 = vmatprep.subr.mxu0 0.0
    %320 = vmatpush1.msra.mxu0 %v283
    %321 = vmatprep.subr.mxu0 0.0
    %322 = vmatpush1.msra.mxu0 %v284
    %323 = vmatprep.subr.mxu0 0.0
    %324 = vmatpush1.msra.mxu0 %v285
    %325 = vmatprep.subr.mxu0 0.0
    %326 = vmatpush1.msra.mxu0 %v286
    %327 = vmatprep.subr.mxu0 0.0
    %328 = vmatpush1.msra.mxu0 %v287
    %329 = vmatprep.subr.mxu0 0.0
    %330 = vmatpush1.msra.mxu0 %v288
    %331 = vmatprep.subr.mxu0 0.0
    %332 = vmatpush1.msra.mxu0 %v289
    %333 = vmatprep.subr.mxu0 0.0
    %334 = vmatpush1.msra.mxu0 %v290
    %335 = vmatprep.subr.mxu0 0.0
    %336 = vmatpush1.msra.mxu0 %v291
    %337 = vmatprep.subr.mxu0 0.0
    %338 = vmatpush1.msra.mxu0 %v292
    %339 = vmatprep.subr.mxu0 0.0
    %340 = vmatpush1.msra.mxu0 %v293
    %341 = vmatprep.subr.mxu0 0.0
    %342 = vmatpush1.msra.mxu0 %v294
    %343 = vmatprep.subr.mxu0 0.0
    %344 = vmatpush1.msra.mxu0 %v295
    %345 = vmatprep.subr.mxu0 0.0
    %346 = vmatpush1.msra.mxu0 %v296
    %347 = vmatprep.subr.mxu0 0.0
    %348 = vmatpush1.msra.mxu0 %v297
    %349 = vmatprep.subr.mxu0 0.0
    %350 = vmatpush1.msra.mxu0 %v298
    %351 = vmatprep.subr.mxu0 0.0
    %352 = vmatpush1.msra.mxu0 %v299
    %353 = vmatprep.subr.mxu0 0.0
    %354 = vmatpush1.msra.mxu0 %v300
    %355 = vmatprep.subr.mxu0 0.0
    %356 = vmatpush1.msra.mxu0 %v301
    %357 = vmatprep.subr.mxu0 0.0
    %358 = vmatpush1.msra.mxu0 %v302
    %359 = vmatprep.subr.mxu0 0.0
    %360 = vmatpush1.msra.mxu0 %v303
    %361 = vmatprep.subr.mxu0 0.0
    %362 = vmatpush1.msra.mxu0 %v304
    %363 = vmatprep.subr.mxu0 0.0
    %364 = vmatpush1.msra.mxu0 %v305
    %365 = vmatprep.subr.mxu0 0.0
    %366 = vmatpush1.msra.mxu0 0.0
    %367 = vmatprep.subr.mxu0 0.0
    %368 = vmatpush1.msra.mxu0 0.0
    %369 = vmatprep.subr.mxu0 0.0
    %370 = vmatpush1.msra.mxu0 0.0
    %371 = vmatprep.subr.mxu0 0.0
    %372 = vmatpush1.msra.mxu0 0.0
    %373 = vmatprep.subr.mxu0 0.0
    %374 = vmatpush1.msra.mxu0 0.0
    %375 = vmatprep.subr.mxu0 0.0
    %376 = vmatpush1.msra.mxu0 0.0
    %377 = vmatprep.subr.mxu0 0.0
    %378 = vmatpush1.msra.mxu0 0.0
    %379 = vmatprep.subr.mxu0 0.0
    %380 = vmatpush1.msra.mxu0 0.0
    %381 = vmatprep.mubr.f32.mxu0 %v315
    %382 = vmatmul.mubr.f32.gmra.mrb[0].mxu0 %v280
    %v383 = vpop.f32.mrb[0].mxu0
    %v384 = vadd.f32 %v311, %v383
    %v385 = vpop.f32.mrb[0].mxu0
    %386 = vdwg.mxu0
    %387 = vst [vmem:[#allocation10] sm:$0xf] %v384
    // Predicated region
    $region46: #{tpu_custom_call.1} parent=1 // pred_check
      _
    $region47: #{tpu_custom_call.1} parent=1 // pred_check_branch
      %389 = sbr.rel (0) target = $region49
    $region48: #{tpu_custom_call.1} parent=1 // pred_region
      %s391 = ssub.s32 64, 64
      %392 = vsyncadd [#allocation4], %s391
      %s394 = sshll.u32 [#allocation10], 4
      %s395 = int_to_ptr.vmem [resolvable:$true] %s394
      %397 = dma.vmem_to_hbm [thread:$0]  %s395, 64, %s7, [#allocation4]
    $region49: #{tpu_custom_call.1} parent=1 // pred_fallthru
      _
    // Predicated region
    $region50: #{tpu_custom_call.1} parent=1 // pred_check
      _
    $region51: #{tpu_custom_call.1} parent=1 // pred_check_branch
      %399 = sbr.rel (0) target = $region53
    $region52: #{tpu_custom_call.1} parent=1 // pred_region
      %400 = dma.done [#allocation4], 64
    $region53: #{tpu_custom_call.1} parent=1 // pred_fallthru
      _
    %401 = vsyncpa [#allocation3], 1
    %402 = vsyncpa [#allocation6], 1
    %403 = vsyncpa [#allocation9], 1
    %404 = vsyncpa [#allocation4], 1

</llo_original>
